<compile_context>
chip_gen: v5e
topology: v5e:2x2
jax: 0.10.0
libtpu: 0.0.40
codegen_flags: <defaults>
</compile_context>

<pallas_src>
import functools

import jax
import jax.numpy as jnp
import numpy as np
from jax.experimental import pallas as pl
from jax.experimental.pallas import tpu as pltpu


def _round_up(x, m):
    return (x + m - 1) // m * m


def _rvq_kernel(x_ref, cb_ref, esq_ref, qout_ref, idx_ref, res_ref, *, bf16_dist):
    """One (token-tile, quantizer-layer) grid step.

    x_ref    : (T_TILE, D_pad)    f32  input tokens (block constant across q -> DMA'd once per tile)
    cb_ref   : (1, K, D_pad)      f32  codebook of layer q
    esq_ref  : (1, 1, K)          f32  precomputed ||E_q||^2
    qout_ref : (T_TILE, D_pad)    f32  accumulated quantized output (revisited across q)
    idx_ref  : (1, T_TILE, 1)     i32  indices for layer q
    res_ref  : (T_TILE, D_pad)    f32  running residual (VMEM scratch, persists across q)
    """
    q = pl.program_id(1)

    @pl.when(q == 0)
    def _init():
        res_ref[...] = x_ref[...]
        qout_ref[...] = jnp.zeros_like(qout_ref)

    embed = cb_ref[0]                         # (K, Dp)
    r = res_ref[...]                          # (Tt, Dp)

    # argmax(-(||r||^2 - 2 r.E^T + ||e||^2)) == argmax(2 r.E^T - ||e||^2):
    # the ||r||^2 term is constant per row, so it never needs to be computed.
    if bf16_dist:
        # v6e/v7x bf16 MXU rate; may flip near-tied argmax vs the f32 reference.
        xet = jax.lax.dot_general(
            r.astype(jnp.bfloat16), embed.astype(jnp.bfloat16),
            (((1,), (1,)), ((), ())), preferred_element_type=jnp.float32)
    else:
        xet = jax.lax.dot_general(
            r, embed, (((1,), (1,)), ((), ())),
            preferred_element_type=jnp.float32)               # (Tt, K)
    score = 2.0 * xet - esq_ref[0]                            # (Tt, K)

    idx = jnp.argmax(score, axis=-1).astype(jnp.int32)        # (Tt,)
    idx_ref[0] = idx[:, None]                                 # column store: no XLU relayout

    # dequantize: one-hot @ codebook (gather expressed as an MXU matmul)
    onehot = (jax.lax.broadcasted_iota(jnp.int32, score.shape, 1)
              == idx[:, None]).astype(jnp.float32)            # (Tt, K)
    quant = jnp.dot(onehot, embed, preferred_element_type=jnp.float32)  # (Tt, Dp)

    res_ref[...] = r - quant
    qout_ref[...] = qout_ref[...] + quant


def rvq_forward(x_bdn, codebooks, *, t_tile=512, bf16_dist=False):
    """x_bdn: (B, D, N) float32, codebooks: (n_q, K, D) float32.
    Returns (quantized_out (B, D, N), indices (n_q, B, N) int32, losses (n_q, 1))."""
    B, D, N = x_bdn.shape
    n_q, K, Dc = codebooks.shape
    assert Dc == D
    T = B * N

    # Lane-dense codebook dim, sublane-aligned token tile, padded token count.
    d_pad = _round_up(max(D, 128), 128)
    t_tile = _round_up(max(8, min(t_tile, _round_up(T, 8))), 8)
    t_pad = _round_up(T, t_tile)
    num_t = t_pad // t_tile

    # b d n -> (b*n, d), zero-padded to (t_pad, d_pad).  Padded rows/cols are zeros;
    # their indices/values are sliced off below.
    # TODO(synk): the two HBM transposes (b d n <-> tokens-major) could be fused into the
    # kernel by tiling over N and relayouting the (D, N_TILE) block inside VMEM.
    x_tokens = jnp.transpose(x_bdn, (0, 2, 1)).reshape(T, D).astype(jnp.float32)
    x_tokens = jnp.pad(x_tokens, ((0, t_pad - T), (0, d_pad - D)))

    cb = codebooks.astype(jnp.float32)
    esq = jnp.sum(cb * cb, axis=-1)[:, None, :]               # (n_q, 1, K) precomputed ||E||^2
    cb_pad = jnp.pad(cb, ((0, 0), (0, 0), (0, d_pad - D)))    # zero pad: distances unchanged

    # VMEM budget: double-buffered input/output blocks + persistent residual scratch.
    blk_bytes = 4 * (2 * t_tile * d_pad        # x + qout blocks
                     + K * d_pad + K           # codebook + ||E||^2 blocks
                     + t_tile)                 # idx block
    vmem_need = 2 * blk_bytes + 4 * t_tile * d_pad
    vmem_limit = int(min(max(2 * vmem_need, 16 << 20), 64 << 20))

    kernel = functools.partial(_rvq_kernel, bf16_dist=bf16_dist)
    qout, idx = pl.pallas_call(
        kernel,
        out_shape=(
            jax.ShapeDtypeStruct((t_pad, d_pad), jnp.float32),
            jax.ShapeDtypeStruct((n_q, t_pad, 1), jnp.int32),
        ),
        grid_spec=pltpu.PrefetchScalarGridSpec(
            num_scalar_prefetch=0,
            grid=(num_t, n_q),
            in_specs=[
                pl.BlockSpec((t_tile, d_pad), lambda t, q: (t, 0)),     # x (constant in q)
                pl.BlockSpec((1, K, d_pad), lambda t, q: (q, 0, 0)),    # codebook layer q
                pl.BlockSpec((1, 1, K), lambda t, q: (q, 0, 0)),        # ||E_q||^2
            ],
            out_specs=(
                pl.BlockSpec((t_tile, d_pad), lambda t, q: (t, 0)),     # qout (revisited over q)
                pl.BlockSpec((1, t_tile, 1), lambda t, q: (q, t, 0)),   # per-layer indices
            ),
            scratch_shapes=[pltpu.VMEM((t_tile, d_pad), jnp.float32)],  # running residual
        ),
        compiler_params=pltpu.CompilerParams(
            dimension_semantics=("parallel", "arbitrary"),
            vmem_limit_bytes=vmem_limit,
        ),
    )(x_tokens, cb_pad, esq)

    quantized_out = jnp.transpose(qout[:T, :D].reshape(B, N, D), (0, 2, 1))  # (B, D, N)
    indices = idx[:, :T, 0].reshape(n_q, B, N)
    # eval-mode per-layer loss is 0.0 (shape (1,) each, stacked -> (n_q, 1))
    losses = jnp.zeros((n_q, 1), jnp.float32)
    # TODO(synk): training-mode side effects (kmeans init on first batch, EMA codebook
    # updates, dead-code expiration, commitment loss) are stateful buffer mutations with
    # no eval-forward equivalent; not implemented here.
    return quantized_out, indices, losses


def _rvq_reference(x_bdn, codebooks):
    """Pure-JAX reference mirroring the PyTorch eval forward."""
    B, D, N = x_bdn.shape
    n_q, K, _ = codebooks.shape
    residual = jnp.transpose(x_bdn, (0, 2, 1)).reshape(B * N, D)
    qout = jnp.zeros_like(residual)
    all_idx = []
    for q in range(n_q):
        E = codebooks[q]
        dist = -(jnp.sum(residual ** 2, 1, keepdims=True)
                 - 2.0 * residual @ E.T
                 + jnp.sum(E ** 2, 1)[None, :])
        idx = jnp.argmax(dist, axis=-1)
        quant = E[idx]
        residual = residual - quant
        qout = qout + quant
        all_idx.append(idx)
    qout = jnp.transpose(qout.reshape(B, N, D), (0, 2, 1))
    return qout, jnp.stack(all_idx).reshape(n_q, B, N)


if __name__ == "__main__":
    # small shapes: num_quantizers=4, codebook_dim D=32, codebook_size K=64,
    # batch B=2, sequence N=9  ->  x: (B, D, N) = (2, 32, 9), T = 18 tokens.
    n_q, D, K = 4, 32, 64
    B, N = 2, 9

    key = jax.random.PRNGKey(0)
    k_x, k_cb = jax.random.split(key)
    x = jax.random.normal(k_x, (B, D, N), dtype=jnp.float32)
    # deterministic synthetic codebooks (kaiming-uniform-like scale, bound=sqrt(6/D))
    bound = float(np.sqrt(6.0 / D))
    codebooks = jax.random.uniform(k_cb, (n_q, K, D), jnp.float32,
                                   minval=-bound, maxval=bound)

    # t_tile=8 forces a multi-tile grid (3 token tiles) with a ragged, zero-padded last tile,
    # exercising the tiling / padding / accumulator paths at small scale.
    quantized_out, indices, losses = rvq_forward(x, codebooks, t_tile=8)
    jax.block_until_ready((quantized_out, indices, losses))

    q_ref, idx_ref = _rvq_reference(x, codebooks)
    assert quantized_out.shape == (B, D, N)
    assert indices.shape == (n_q, B, N)
    assert losses.shape == (n_q, 1)
    np.testing.assert_allclose(np.asarray(quantized_out), np.asarray(q_ref),
                               rtol=1e-5, atol=1e-5)
    np.testing.assert_array_equal(np.asarray(indices), np.asarray(idx_ref))

    print("KERNEL_OK")
</pallas_src>

<mosaic_0001>
module attributes {stable_mosaic.version = 11 : i64} {
  func.func @_rvq_kernel(%arg0: i32, %arg1: i32, %arg2: memref<8x128xf32, #tpu.memory_space<vmem>>, %arg3: memref<1x64x128xf32, #tpu.memory_space<vmem>>, %arg4: memref<1x1x64xf32, #tpu.memory_space<vmem>>, %arg5: memref<8x128xf32, #tpu.memory_space<vmem>>, %arg6: memref<1x8x1xi32, #tpu.memory_space<vmem>>, %arg7: memref<8x128xf32, #tpu.memory_space<vmem>>) attributes {dimension_semantics = [#tpu.dimension_semantics<parallel>, #tpu.dimension_semantics<arbitrary>], iteration_bounds = array<i64: 3, 4>, scalar_prefetch = 0 : i64, scratch_operands = 1 : i64, tpu.core_type = #tpu.core_type<tc>, window_params = [{transform_indices = @transform_0, window_bounds = array<i64: 8, 128>}, {transform_indices = @transform_1, window_bounds = array<i64: 1, 64, 128>}, {transform_indices = @transform_2, window_bounds = array<i64: 1, 1, 64>}, {transform_indices = @transform_3, window_bounds = array<i64: 8, 128>}, {transform_indices = @transform_4, window_bounds = array<i64: 1, 8, 1>}]} {
    %c0_i32 = arith.constant 0 : i32
    %0 = arith.cmpi eq, %arg1, %c0_i32 : i32
    %1 = arith.extui %0 : i1 to i32
    %c0_i32_0 = arith.constant 0 : i32
    %2 = arith.cmpi ne, %1, %c0_i32_0 : i32
    scf.if %2 {
      %c0_19 = arith.constant 0 : index
      %c0_20 = arith.constant 0 : index
      %30 = vector.load %arg2[%c0_19, %c0_20] : memref<8x128xf32, #tpu.memory_space<vmem>>, vector<8x128xf32>
      %c0_21 = arith.constant 0 : index
      %c0_22 = arith.constant 0 : index
      %31 = vector.load %arg7[%c0_21, %c0_22] : memref<8x128xf32, #tpu.memory_space<vmem>>, vector<8x128xf32>
      tpu.vector_store %arg7[%c0_21, %c0_22], %30 {strides = array<i32>} : memref<8x128xf32, #tpu.memory_space<vmem>>, vector<8x128xf32>,
      %cst_23 = arith.constant 0.000000e+00 : f32
      %32 = vector.broadcast %cst_23 : f32 to vector<8x128xf32>
      %c0_24 = arith.constant 0 : index
      %c0_25 = arith.constant 0 : index
      %33 = vector.load %arg5[%c0_24, %c0_25] : memref<8x128xf32, #tpu.memory_space<vmem>>, vector<8x128xf32>
      tpu.vector_store %arg5[%c0_24, %c0_25], %32 {strides = array<i32>} : memref<8x128xf32, #tpu.memory_space<vmem>>, vector<8x128xf32>,
    } else {
    }
    %c0 = arith.constant 0 : index
    %c0_1 = arith.constant 0 : index
    %c0_2 = arith.constant 0 : index
    %3 = vector.load %arg3[%c0, %c0_1, %c0_2] : memref<1x64x128xf32, #tpu.memory_space<vmem>>, vector<1x64x128xf32>
    %4 = vector.shape_cast %3 : vector<1x64x128xf32> to vector<64x128xf32>
    %c0_3 = arith.constant 0 : index
    %c0_4 = arith.constant 0 : index
    %5 = vector.load %arg7[%c0_3, %c0_4] : memref<8x128xf32, #tpu.memory_space<vmem>>, vector<8x128xf32>
    %cst = arith.constant dense<0.000000e+00> : vector<8x64xf32>
    %6 = tpu.matmul %5, %4, %cst {dimension_numbers = #tpu.dot_dimension_numbers<[1], [1], [0], [0], [0, 0, 1, 0], [], []>} : vector<8x128xf32>, vector<64x128xf32>, vector<8x64xf32> -> vector<8x64xf32>
    %cst_5 = arith.constant 2.000000e+00 : f32
    %7 = vector.broadcast %cst_5 : f32 to vector<8x64xf32>
    %8 = arith.mulf %7, %6 : vector<8x64xf32>
    %c0_6 = arith.constant 0 : index
    %c0_7 = arith.constant 0 : index
    %c0_8 = arith.constant 0 : index
    %9 = vector.load %arg4[%c0_6, %c0_7, %c0_8] : memref<1x1x64xf32, #tpu.memory_space<vmem>>, vector<1x1x64xf32>
    %10 = vector.shape_cast %9 : vector<1x1x64xf32> to vector<1x64xf32>
    %11 = vector.broadcast %10 : vector<1x64xf32> to vector<8x64xf32>
    %12 = arith.subf %8, %11 : vector<8x64xf32>
    %13 = tpu.reduce_index %12 {axis = 1 : i32, kind = #tpu.reduction_kind<arg_max>} : vector<8x64xf32> -> vector<8xi32>
    %14 = vector.shape_cast %13 : vector<8xi32> to vector<8x1xi32>
    %c0_9 = arith.constant 0 : index
    %c0_10 = arith.constant 0 : index
    %c0_11 = arith.constant 0 : index
    %15 = vector.load %arg6[%c0_9, %c0_10, %c0_11] : memref<1x8x1xi32, #tpu.memory_space<vmem>>, vector<1x8x1xi32>
    %16 = vector.shape_cast %15 : vector<1x8x1xi32> to vector<8x1xi32>
    %17 = vector.shape_cast %14 : vector<8x1xi32> to vector<1x8x1xi32>
    tpu.vector_store %arg6[%c0_9, %c0_10, %c0_11], %17 {strides = array<i32>} : memref<1x8x1xi32, #tpu.memory_space<vmem>>, vector<1x8x1xi32>,
    %18 = tpu.iota {dimensions = array<i32: 1>} : vector<8x64xi32>
    %19 = vector.shape_cast %13 : vector<8xi32> to vector<8x1xi32>
    %20 = vector.broadcast %19 : vector<8x1xi32> to vector<8x64xi32>
    %21 = arith.cmpi eq, %18, %20 : vector<8x64xi32>
    %22 = arith.extui %21 : vector<8x64xi1> to vector<8x64xi32>
    %23 = arith.sitofp %22 : vector<8x64xi32> to vector<8x64xf32>
    %cst_12 = arith.constant dense<0.000000e+00> : vector<8x128xf32>
    %24 = tpu.matmul %23, %4, %cst_12 {dimension_numbers = #tpu.dot_dimension_numbers<[1], [0], [0], [1], [0, 0, 1, 1], [], []>} : vector<8x64xf32>, vector<64x128xf32>, vector<8x128xf32> -> vector<8x128xf32>
    %25 = arith.subf %5, %24 : vector<8x128xf32>
    %c0_13 = arith.constant 0 : index
    %c0_14 = arith.constant 0 : index
    %26 = vector.load %arg7[%c0_13, %c0_14] : memref<8x128xf32, #tpu.memory_space<vmem>>, vector<8x128xf32>
    tpu.vector_store %arg7[%c0_13, %c0_14], %25 {strides = array<i32>} : memref<8x128xf32, #tpu.memory_space<vmem>>, vector<8x128xf32>,
    %c0_15 = arith.constant 0 : index
    %c0_16 = arith.constant 0 : index
    %27 = vector.load %arg5[%c0_15, %c0_16] : memref<8x128xf32, #tpu.memory_space<vmem>>, vector<8x128xf32>
    %28 = arith.addf %27, %24 : vector<8x128xf32>
    %c0_17 = arith.constant 0 : index
    %c0_18 = arith.constant 0 : index
    %29 = vector.load %arg5[%c0_17, %c0_18] : memref<8x128xf32, #tpu.memory_space<vmem>>, vector<8x128xf32>
    tpu.vector_store %arg5[%c0_17, %c0_18], %28 {strides = array<i32>} : memref<8x128xf32, #tpu.memory_space<vmem>>, vector<8x128xf32>,
    return
  }
  func.func @transform_0(%arg0: i32, %arg1: i32) -> (i32, i32) {
    %c0_i32 = arith.constant 0 : i32
    %c0_i32_0 = arith.constant 0 : i32
    return %arg0, %c0_i32 : i32, i32
  }
  func.func @transform_1(%arg0: i32, %arg1: i32) -> (i32, i32, i32) {
    %c0_i32 = arith.constant 0 : i32
    %c0_i32_0 = arith.constant 0 : i32
    %c0_i32_1 = arith.constant 0 : i32
    return %arg1, %c0_i32, %c0_i32_0 : i32, i32, i32
  }
  func.func @transform_2(%arg0: i32, %arg1: i32) -> (i32, i32, i32) {
    %c0_i32 = arith.constant 0 : i32
    %c0_i32_0 = arith.constant 0 : i32
    %c0_i32_1 = arith.constant 0 : i32
    return %arg1, %c0_i32, %c0_i32_0 : i32, i32, i32
  }
  func.func @transform_3(%arg0: i32, %arg1: i32) -> (i32, i32) {
    %c0_i32 = arith.constant 0 : i32
    %c0_i32_0 = arith.constant 0 : i32
    return %arg0, %c0_i32 : i32, i32
  }
  func.func @transform_4(%arg0: i32, %arg1: i32) -> (i32, i32, i32) {
    %c0_i32 = arith.constant 0 : i32
    %c0_i32_0 = arith.constant 0 : i32
    return %arg1, %arg0, %c0_i32 : i32, i32, i32
  }
}

</mosaic_0001>

<llo_original>
// kernel: tpu_custom_call.1
$region0: #{tpu_custom_call.1}
  #allocation0 [shape = 'u32[]', space=smem, size = 0x4, offset = 0x4, fixed_abs, tag = 'smem constant byte address 0x4 - core index']
  #allocation1 [shape = 'u32[72,128]{1,0:T(1,128)}', space=vmem, size = 0x9000, scoped, tag = 'internal scratch']
  #allocation2 [shape = 'f32[8,128]{1,0:T(8,128)}', space=vmem, size = 0x1000, scoped, tag = 'scratch operand']
  %s0 = inlined_call_operand.hbm [shape: f32[24,128], index: 0, kind: input, shape index: {}]
  %s1 = inlined_call_operand.hbm [shape: f32[4,64,128], index: 1, kind: input, shape index: {}]
  %s2 = inlined_call_operand.hbm [shape: f32[4,1,64], index: 2, kind: input, shape index: {}]
  %s3 = inlined_call_operand.hbm [shape: f32[24,128], index: 3, kind: output, shape index: {0}]
  %s4 = inlined_call_operand.vmem [shape: s32[4,24,1], index: 4, kind: output, shape index: {1}]
  %5 = xla_tuple %s3, %s4
  %s6 = sld [smem:[#allocation0]]
  $region69: #{tpu_custom_call.1} parent=0
    _
  %s8 = ssub.s32 1, %s6
  %s9 = scalar_select 0, %s8, %s6
  $region1: #{tpu_custom_call.1} parent=0
    #allocation3 [shape = 'u8[8192]{0}', space=vmem, size = 0x2000, scoped, tag = 'input window, operand 0']
    #allocation4 [shape = 's32[2]{0}', space=sflag, size = 0x8, scoped, tag = 'scoped memory for tpu_custom_call.1']
    #allocation5 [shape = 's32[2]{0}', space=sflag, size = 0x8, scoped, tag = 'scoped memory for tpu_custom_call.1']
    #allocation6 [shape = 'u8[65536]{0}', space=vmem, size = 0x10000, scoped, tag = 'input window, operand 1']
    #allocation7 [shape = 's32[2]{0}', space=sflag, size = 0x8, scoped, tag = 'scoped memory for tpu_custom_call.1']
    #allocation8 [shape = 'u8[1024]{0}', space=vmem, size = 0x400, scoped, tag = 'input window, operand 2']
    #allocation9 [shape = 'u8[8192]{0}', space=vmem, size = 0x2000, scoped, tag = 'output window, operand 0']
    %10 = vsyncpa [#allocation4], 0
    %s11 = scalar_lea.sflag [#allocation4], 1
    %12 = vsyncpa %s11, 0
    %13 = vsyncpa [#allocation7], 0
    %s14 = scalar_lea.sflag [#allocation7], 1
    %15 = vsyncpa %s14, 0
    %16 = vsyncpa [#allocation5], 0
    %s17 = scalar_lea.sflag [#allocation5], 1
    %18 = vsyncpa %s17, 0
    loop: start=0, step=1, limit=14
    $region2: #{tpu_custom_call.1} parent=1 // loop_pre_header
      _
    $region3: #{tpu_custom_call.1} parent=1 // loop_header
      %s20 = sphi 0, %s24
      %p21 = scmp.ge.s32.totalorder %s20, 14
      %s27 = sphi 0, %s39
      %s28 = sphi 0, %s35
      %s29 = sphi 0, %s27
      %s30 = sphi 0, %s28
      %s31 = sphi 0, %s29
      %s32 = sphi 0, %s30
      %s42 = sphi 0, %s44
      %s45 = sphi 0, %s42
      %s46 = sphi 0, %s45
      %s62 = sphi 0, %s46
      %s68 = sphi 0, %s70
      %s71 = sphi 0, %s68
      %s72 = sphi 0, %s71
      %s88 = sphi 0, %s72
      %s94 = sphi 0, %s96
      %s97 = sphi 0, %s94
      %s98 = sphi 0, %s97
      %s114 = sphi 0, %s98
      %s120 = sphi 0, %s122
      %s123 = sphi 0, %s120
      %s124 = sphi 0, %s123
      %s140 = sphi 0, %s124
      %s148 = sphi 0, %s150
      %s151 = sphi 0, %s148
      %s152 = sphi 0, %s151
      %s168 = sphi 0, %s152
    $region4: #{tpu_custom_call.1} parent=1 // loop_header_branch
      %23 = sbr.rel (%p21) target = $region8
    $region5: #{tpu_custom_call.1} parent=1 // loop_body
      %s25 = ssub.s32 %s20, 1
      %s26 = ssub.s32 %s20, 2
      %s33 = sadd.s32 1, %s28
      %p34 = scmp.ge.s32.totalorder %s33, 4
      %s35 = scalar_select %p34, 0, %s33
      %s36 = sadd.s32 1, %s27
      %s37 = scalar_select %p34, %s36, %s27
      %p38 = scmp.ge.s32.totalorder %s37, 3
      %s39 = scalar_select %p38, 0, %s37
      %s40 = ssub.s32 %s27, %s39
      %p41 = scmp.eq.s32.totalorder %s40, 0
      %s43 = sadd.s32 %s42, 1
      %s44 = scalar_select %p41, %s42, %s43
      %p47 = pneg %p41
      %p48 = scmp.eq.s32.totalorder %s20, 11
      %p49 = por %p47, %p48
      %p50 = scmp.ne.s32.totalorder %s42, %s45
      %p51 = scmp.eq.s32.totalorder %s20, 0
      %p52 = por %p50, %p51
      %p53 = scmp.ne.s32.totalorder %s42, %s45
      %p54 = scmp.eq.s32.totalorder %s25, 11
      %p55 = por %p53, %p54
      %p56 = scmp.ne.s32.totalorder %s45, %s46
      %p57 = scmp.eq.s32.totalorder %s25, 0
      %p58 = por %p56, %p57
      %p59 = scmp.ne.s32.totalorder %s45, %s46
      %p60 = scmp.eq.s32.totalorder %s26, 11
      %p61 = por %p59, %p60
      %p63 = scmp.ne.s32.totalorder %s46, %s62
      %p64 = scmp.eq.s32.totalorder %s26, 0
      %p65 = por %p63, %p64
      %s66 = ssub.s32 %s28, %s35
      %p67 = scmp.eq.s32.totalorder %s66, 0
      %s69 = sadd.s32 %s68, 1
      %s70 = scalar_select %p67, %s68, %s69
      %p73 = pneg %p67
      %p74 = scmp.eq.s32.totalorder %s20, 11
      %p75 = por %p73, %p74
      %p76 = scmp.ne.s32.totalorder %s68, %s71
      %p77 = scmp.eq.s32.totalorder %s20, 0
      %p78 = por %p76, %p77
      %p79 = scmp.ne.s32.totalorder %s68, %s71
      %p80 = scmp.eq.s32.totalorder %s25, 11
      %p81 = por %p79, %p80
      %p82 = scmp.ne.s32.totalorder %s71, %s72
      %p83 = scmp.eq.s32.totalorder %s25, 0
      %p84 = por %p82, %p83
      %p85 = scmp.ne.s32.totalorder %s71, %s72
      %p86 = scmp.eq.s32.totalorder %s26, 11
      %p87 = por %p85, %p86
      %p89 = scmp.ne.s32.totalorder %s72, %s88
      %p90 = scmp.eq.s32.totalorder %s26, 0
      %p91 = por %p89, %p90
      %s92 = ssub.s32 %s28, %s35
      %p93 = scmp.eq.s32.totalorder %s92, 0
      %s95 = sadd.s32 %s94, 1
      %s96 = scalar_select %p93, %s94, %s95
      %p99 = pneg %p93
      %p100 = scmp.eq.s32.totalorder %s20, 11
      %p101 = por %p99, %p100
      %p102 = scmp.ne.s32.totalorder %s94, %s97
      %p103 = scmp.eq.s32.totalorder %s20, 0
      %p104 = por %p102, %p103
      %p105 = scmp.ne.s32.totalorder %s94, %s97
      %p106 = scmp.eq.s32.totalorder %s25, 11
      %p107 = por %p105, %p106
      %p108 = scmp.ne.s32.totalorder %s97, %s98
      %p109 = scmp.eq.s32.totalorder %s25, 0
      %p110 = por %p108, %p109
      %p111 = scmp.ne.s32.totalorder %s97, %s98
      %p112 = scmp.eq.s32.totalorder %s26, 11
      %p113 = por %p111, %p112
      %p115 = scmp.ne.s32.totalorder %s98, %s114
      %p116 = scmp.eq.s32.totalorder %s26, 0
      %p117 = por %p115, %p116
      %s118 = ssub.s32 %s27, %s39
      %p119 = scmp.eq.s32.totalorder %s118, 0
      %s121 = sadd.s32 %s120, 1
      %s122 = scalar_select %p119, %s120, %s121
      %p125 = pneg %p119
      %p126 = scmp.eq.s32.totalorder %s20, 11
      %p127 = por %p125, %p126
      %p128 = scmp.ne.s32.totalorder %s120, %s123
      %p129 = scmp.eq.s32.totalorder %s20, 0
      %p130 = por %p128, %p129
      %p131 = scmp.ne.s32.totalorder %s120, %s123
      %p132 = scmp.eq.s32.totalorder %s25, 11
      %p133 = por %p131, %p132
      %p134 = scmp.ne.s32.totalorder %s123, %s124
      %p135 = scmp.eq.s32.totalorder %s25, 0
      %p136 = por %p134, %p135
      %p137 = scmp.ne.s32.totalorder %s123, %s124
      %p138 = scmp.eq.s32.totalorder %s26, 11
      %p139 = por %p137, %p138
      %p141 = scmp.ne.s32.totalorder %s124, %s140
      %p142 = scmp.eq.s32.totalorder %s26, 0
      %p143 = por %p141, %p142
      %s144 = ssub.s32 %s28, %s35
      %s145 = ssub.s32 %s27, %s39
      %s146 = sor.u32 %s144, %s145
      %p147 = scmp.eq.s32.totalorder %s146, 0
      %s149 = sadd.s32 %s148, 1
      %s150 = scalar_select %p147, %s148, %s149
      %p153 = pneg %p147
      %p154 = scmp.eq.s32.totalorder %s20, 11
      %p155 = por %p153, %p154
      %p156 = scmp.ne.s32.totalorder %s148, %s151
      %p157 = scmp.eq.s32.totalorder %s20, 0
      %p158 = por %p156, %p157
      %p159 = scmp.ne.s32.totalorder %s148, %s151
      %p160 = scmp.eq.s32.totalorder %s25, 11
      %p161 = por %p159, %p160
      %p162 = scmp.ne.s32.totalorder %s151, %s152
      %p163 = scmp.eq.s32.totalorder %s25, 0
      %p164 = por %p162, %p163
      %p165 = scmp.ne.s32.totalorder %s151, %s152
      %p166 = scmp.eq.s32.totalorder %s26, 11
      %p167 = por %p165, %p166
      %p169 = scmp.ne.s32.totalorder %s152, %s168
      %p170 = scmp.eq.s32.totalorder %s26, 0
      %p171 = por %p169, %p170
      %p172 = scmp.le.s32.totalorder 1, %s20
      %p173 = scmp.lt.s32.totalorder %s20, 13
      %p174 = pnand %p172, %p173
      %p175 = pneg %p174
      // Predicated region
      $region9: #{tpu_custom_call.1} parent=5 // pred_check
        _
      $region10: #{tpu_custom_call.1} parent=5 // pred_check_branch
        %177 = sbr.rel (%p174) target = $region12
      $region11: #{tpu_custom_call.1} parent=5 // pred_region
        %s178 = ssub.s32 %s20, 1
      $region12: #{tpu_custom_call.1} parent=5 // pred_fallthru
        _
      %p179 = scmp.lt.s32.totalorder %s20, 12
      // Predicated region
      $region13: #{tpu_custom_call.1} parent=5 // pred_check
        %p180 = pneg %p179
      $region14: #{tpu_custom_call.1} parent=5 // pred_check_branch
        %182 = sbr.rel (%p180) target = $region16
      $region15: #{tpu_custom_call.1} parent=5 // pred_region
        // Predicated region
        $region17: #{tpu_custom_call.1} parent=15 // pred_check
          %p183 = pneg %p52
        $region18: #{tpu_custom_call.1} parent=15 // pred_check_branch
          %185 = sbr.rel (%p183) target = $region20
        $region19: #{tpu_custom_call.1} parent=15 // pred_region
          %s186 = sand.u32 %s42, 1
          %s187 = scalar_lea.sflag [#allocation4], %s186
          %s188 = sand.u32 %s42, 1
          %s189 = smul.addr %s188, 8
          %s190 = scalar_lea.vmem [#allocation3], %s189
          %192 = vsyncadd %s187, 0
          %s193 = smul.addr %s27, 8
          %s194 = scalar_lea.hbm %s0, %s193
          %s196 = sshll.u32 %s194, 4
          %s197 = int_to_ptr.hbm [resolvable:$true] %s196
          %s198 = sshll.u32 %s190, 4
          %s199 = int_to_ptr.vmem [resolvable:$true] %s198
          %201 = dma.hbm_to_vmem [thread:$0]  %s197, 128, %s199, %s187
        $region20: #{tpu_custom_call.1} parent=15 // pred_fallthru
          _
        // Predicated region
        $region21: #{tpu_custom_call.1} parent=15 // pred_check
          %p202 = pneg %p78
        $region22: #{tpu_custom_call.1} parent=15 // pred_check_branch
          %204 = sbr.rel (%p202) target = $region24
        $region23: #{tpu_custom_call.1} parent=15 // pred_region
          %s205 = sand.u32 %s20, 1
          %s206 = scalar_lea.sflag [#allocation7], %s205
          %s207 = sand.u32 %s68, 1
          %s208 = smul.addr %s207, 64
          %s209 = scalar_lea.vmem [#allocation6], %s208
          %211 = vsyncadd %s206, 0
          %s212 = smul.addr %s28, 8
          %s213 = smul.addr %s212, 8
          %s214 = scalar_lea.hbm %s1, %s213
          %s215 = sshll.u32 %s214, 4
          %s216 = int_to_ptr.hbm [resolvable:$true] %s215
          %s217 = sshll.u32 %s209, 4
          %s218 = int_to_ptr.vmem [resolvable:$true] %s217
          %223 = dma.hbm_to_vmem [thread:$0]  %s216, 1024, %s218, %s206, 128, 128, 8
        $region24: #{tpu_custom_call.1} parent=15 // pred_fallthru
          _
        // Predicated region
        $region25: #{tpu_custom_call.1} parent=15 // pred_check
          %p224 = pneg %p104
        $region26: #{tpu_custom_call.1} parent=15 // pred_check_branch
          %226 = sbr.rel (%p224) target = $region28
        $region27: #{tpu_custom_call.1} parent=15 // pred_region
          %s227 = sand.u32 %s20, 1
          %s228 = scalar_lea.sflag [#allocation7], %s227
          %s229 = sand.u32 %s94, 1
          %s230 = scalar_lea.vmem [#allocation8], %s229
          %232 = vsyncadd %s228, 0
          %s233 = scalar_lea.hbm %s2, %s28
          %s235 = sshll.u32 %s233, 4
          %s236 = int_to_ptr.hbm [resolvable:$true] %s235
          %s237 = sshll.u32 %s230, 4
          %s238 = int_to_ptr.vmem [resolvable:$true] %s237
          %240 = dma.hbm_to_vmem [thread:$0]  %s236, 16, %s238, %s228
        $region28: #{tpu_custom_call.1} parent=15 // pred_fallthru
          _
      $region16: #{tpu_custom_call.1} parent=5 // pred_fallthru
        _
      %p241 = scmp.le.s32.totalorder 1, %s20
      %p242 = scmp.lt.s32.totalorder %s20, 13
      %p243 = pnand %p241, %p242
      %p244 = pneg %p243
      // Predicated region
      $region29: #{tpu_custom_call.1} parent=5 // pred_check
        _
      $region30: #{tpu_custom_call.1} parent=5 // pred_check_branch
        %246 = sbr.rel (%p243) target = $region32
      $region31: #{tpu_custom_call.1} parent=5 // pred_region
        %s247 = ssub.s32 %s20, 1
        %s248 = sand.u32 %s45, 1
        %s249 = scalar_lea.sflag [#allocation4], %s248
        %s250 = sand.u32 %s45, 1
        %s251 = smul.addr %s250, 8
        %s252 = scalar_lea.vmem [#allocation3], %s251
        // Predicated region
        $region33: #{tpu_custom_call.1} parent=31 // pred_check
          %p253 = pneg %p58
        $region34: #{tpu_custom_call.1} parent=31 // pred_check_branch
          %255 = sbr.rel (%p253) target = $region36
        $region35: #{tpu_custom_call.1} parent=31 // pred_region
          %257 = dma.done %s249, 128
        $region36: #{tpu_custom_call.1} parent=31 // pred_fallthru
          _
        %s258 = sand.u32 %s25, 1
        %s259 = scalar_lea.sflag [#allocation7], %s258
        %s260 = sand.u32 %s71, 1
        %s261 = smul.addr %s260, 64
        %s262 = scalar_lea.vmem [#allocation6], %s261
        // Predicated region
        $region37: #{tpu_custom_call.1} parent=31 // pred_check
          %p263 = pneg %p84
        $region38: #{tpu_custom_call.1} parent=31 // pred_check_branch
          %265 = sbr.rel (%p263) target = $region40
        $region39: #{tpu_custom_call.1} parent=31 // pred_region
          %267 = dma.done %s259, 1024
        $region40: #{tpu_custom_call.1} parent=31 // pred_fallthru
          _
        %s268 = sand.u32 %s25, 1
        %s269 = scalar_lea.sflag [#allocation7], %s268
        %s270 = sand.u32 %s97, 1
        %s271 = scalar_lea.vmem [#allocation8], %s270
        // Predicated region
        $region41: #{tpu_custom_call.1} parent=31 // pred_check
          %p272 = pneg %p110
        $region42: #{tpu_custom_call.1} parent=31 // pred_check_branch
          %274 = sbr.rel (%p272) target = $region44
        $region43: #{tpu_custom_call.1} parent=31 // pred_region
          %276 = dma.done %s269, 16
        $region44: #{tpu_custom_call.1} parent=31 // pred_fallthru
          _
        %s277 = sand.u32 %s45, 1
        %s278 = scalar_lea.sflag [#allocation4], %s277
        %s279 = sand.u32 %s45, 1
        %s280 = smul.addr %s279, 8
        %s281 = scalar_lea.vmem [#allocation3], %s280
        %p282 = pneg %p58
        %p283 = pneg %p55
        %s284 = sand.u32 %s25, 1
        %s285 = scalar_lea.sflag [#allocation7], %s284
        %s286 = sand.u32 %s71, 1
        %s287 = smul.addr %s286, 64
        %s288 = scalar_lea.vmem [#allocation6], %s287
        %p289 = pneg %p84
        %p290 = pneg %p81
        %s291 = sand.u32 %s25, 1
        %s292 = scalar_lea.sflag [#allocation7], %s291
        %s293 = sand.u32 %s97, 1
        %s294 = scalar_lea.vmem [#allocation8], %s293
        %p295 = pneg %p110
        %p296 = pneg %p107
        %p297 = pneg %p136
        %p298 = pneg %p133
        %s299 = sand.u32 %s123, 1
        %s300 = scalar_lea.sflag [#allocation5], %s299
        %s301 = sand.u32 %s123, 1
        %s302 = smul.addr %s301, 8
        %s303 = scalar_lea.vmem [#allocation9], %s302
        %p304 = pneg %p164
        %p305 = pneg %p161
        %p306 = scmp.lt.s32.totalorder %s30, 3
        %s307 = scalar_select %p306, %s30, 3
        %p308 = scmp.lt.s32.totalorder %s29, 2
        %s309 = scalar_select %p308, %s29, 2
        %s310 = smul.addr %s307, 3
        %s311 = sadd.s32 %s309, %s310
        %s312 = smul.addr %s311, 8
        %s313 = scalar_lea.vmem %s4, %s312
        %p314 = scmp.lt.s32.totalorder %s30, 3
        %s315 = scalar_select %p314, %s30, 3
        %p316 = scmp.lt.s32.totalorder %s29, 2
        %s317 = scalar_select %p316, %s29, 2
        %s318 = smul.addr %s315, 3
        %s319 = sadd.s32 %s317, %s318
        %s320 = smul.addr %s319, 8
        %s321 = scalar_lea.vmem %s4, %s320
        %p322 = scmp.eq.s32.totalorder %s30, 0
        // Predicated region
        $region45: #{tpu_custom_call.1} parent=31 // pred_check
          %p323 = pneg %p322
        $region46: #{tpu_custom_call.1} parent=31 // pred_check_branch
          %325 = sbr.rel (%p323) target = $region48
        $region47: #{tpu_custom_call.1} parent=31 // pred_region
          %v326 = vld [vmem:[%s252] sm:$0xff]
          %327 = vst [vmem:[#allocation2] sm:$0xff] %v326
          %328 = vst [vmem:[%s303] sm:$0xff] 0.0
        $region48: #{tpu_custom_call.1} parent=31 // pred_fallthru
          _
        %v329 = vld [vmem:[%s262] sm:$0xff]
        %v330 = vld [vmem:[%s262 + $0x8] sm:$0xff]
        %v331 = vld [vmem:[%s262 + $0x10] sm:$0xff]
        %v332 = vld [vmem:[%s262 + $0x18] sm:$0xff]
        %v333 = vld [vmem:[%s262 + $0x20] sm:$0xff]
        %v334 = vld [vmem:[%s262 + $0x28] sm:$0xff]
        %v335 = vld [vmem:[%s262 + $0x30] sm:$0xff]
        %v336 = vld [vmem:[%s262 + $0x38] sm:$0xff]
        %v337 = vld [vmem:[#allocation2] sm:$0xff]
        %338 = vmatpush.xpose.msra.mxu0 0.0
        %339 = vmatpush.xpose.msra.mxu0 0.0
        %340 = vmatpush.xpose.msra.mxu0 0.0
        %341 = vmatpush.xpose.msra.mxu0 0.0
        %342 = vmatpush.xpose.msra.mxu0 0.0
        %343 = vmatpush.xpose.msra.mxu0 0.0
        %344 = vmatpush.xpose.msra.mxu0 0.0
        %345 = vmatpush.xpose.msra.mxu0 0.0
        %346 = vmatpush.xpose.msra.mxu0 %v336
        %347 = vmatpush.xpose.msra.mxu0 %v335
        %348 = vmatpush.xpose.msra.mxu0 %v334
        %349 = vmatpush.xpose.msra.mxu0 %v333
        %350 = vmatpush.xpose.msra.mxu0 %v332
        %351 = vmatpush.xpose.msra.mxu0 %v331
        %352 = vmatpush.xpose.msra.mxu0 %v330
        %353 = vmatpush.xpose.msra.mxu0 %v329
        %354 = vmatmul.f32.gmra.mxu0 %v337
        %v355 = vpop.f32.mrf.mxu0
        %v356 = vadd.f32 0.0, %v355
        %357 = vdwg.mxu0
        %v358 = vmul.f32 %v356, 2.0
        %v359 = vld [vmem:[%s271] sm:$0x1]
        %v361 = vperm.slane %v359, 0
        %v363 = vsub.f32 %v358, %v361
        %vm364 = vcmask 523264
        %v365 = vsel %vm364, %v363, -inf
        %366 = vmax.index.xlane.f32.xlu0 %v365
        %v367 = vpop.xlane.xlu0 %366
        %vm368 = vcmask 7168
        %369 = vst.msk [vmem:[%s321] sm:$0xff] %vm368, %v367
        %v370 = vlaneseq
        %v371 = vand.u32 %v370, 127
        %vm372 = vcmp.eq.s32.totalorder %v371, %v367
        %v373 = vsel %vm372, 1, 0
        %v374 = vcvt.s32.f32 %v373
        %v376 = vsel %vm364, %v374, 0
        %378 = vmatpush.msra.mxu0 0.0
        %379 = vmatpush.msra.mxu0 0.0
        %380 = vmatpush.msra.mxu0 0.0
        %381 = vmatpush.msra.mxu0 0.0
        %382 = vmatpush.msra.mxu0 0.0
        %383 = vmatpush.msra.mxu0 0.0
        %384 = vmatpush.msra.mxu0 0.0
        %385 = vmatpush.msra.mxu0 0.0
        %386 = vmatpush.msra.mxu0 %v336
        %387 = vmatpush.msra.mxu0 %v335
        %388 = vmatpush.msra.mxu0 %v334
        %389 = vmatpush.msra.mxu0 %v333
        %390 = vmatpush.msra.mxu0 %v332
        %391 = vmatpush.msra.mxu0 %v331
        %392 = vmatpush.msra.mxu0 %v330
        %393 = vmatpush.msra.mxu0 %v329
        %394 = vmatmul.f32.gmra.mxu0 %v376
        %v395 = vpop.f32.mrf.mxu0
        %v396 = vadd.f32 0.0, %v395
        %397 = vdwg.mxu0
        %v398 = vsub.f32 %v337, %v396
        %399 = vst [vmem:[#allocation2] sm:$0xff] %v398
        %v400 = vld [vmem:[%s303] sm:$0xff]
        %v401 = vadd.f32 %v400, %v396
        %402 = vst [vmem:[%s303] sm:$0xff] %v401
        %s403 = sand.u32 %s123, 1
        %s404 = scalar_lea.sflag [#allocation5], %s403
        %s405 = sand.u32 %s123, 1
        %s406 = smul.addr %s405, 8
        %s407 = scalar_lea.vmem [#allocation9], %s406
        %p408 = scmp.lt.s32.totalorder %s30, 3
        %s409 = scalar_select %p408, %s30, 3
        %p410 = scmp.lt.s32.totalorder %s29, 2
        %s411 = scalar_select %p410, %s29, 2
        %s412 = smul.addr %s409, 3
        %s413 = sadd.s32 %s411, %s412
        %s414 = smul.addr %s413, 8
        %s415 = scalar_lea.vmem %s4, %s414
        // Predicated region
        $region49: #{tpu_custom_call.1} parent=31 // pred_check
          %p416 = pneg %p133
        $region50: #{tpu_custom_call.1} parent=31 // pred_check_branch
          %418 = sbr.rel (%p416) target = $region52
        $region51: #{tpu_custom_call.1} parent=31 // pred_region
          %420 = vsyncadd %s404, 0
          %s421 = smul.addr %s29, 8
          %s422 = scalar_lea.hbm %s3, %s421
          %s424 = sshll.u32 %s407, 4
          %s425 = int_to_ptr.vmem [resolvable:$true] %s424
          %s426 = sshll.u32 %s422, 4
          %s427 = int_to_ptr.hbm [resolvable:$true] %s426
          %429 = dma.vmem_to_hbm [thread:$0]  %s425, 128, %s427, %s404
        $region52: #{tpu_custom_call.1} parent=31 // pred_fallthru
          _
        // Predicated region
        $region53: #{tpu_custom_call.1} parent=31 // pred_check
          %p430 = pneg %p161
        $region54: #{tpu_custom_call.1} parent=31 // pred_check_branch
          %432 = sbr.rel (%p430) target = $region56
        $region55: #{tpu_custom_call.1} parent=31 // pred_region
          _
        $region56: #{tpu_custom_call.1} parent=31 // pred_fallthru
          _
      $region32: #{tpu_custom_call.1} parent=5 // pred_fallthru
        _
      %p433 = scmp.le.s32.totalorder 2, %s20
      // Predicated region
      $region57: #{tpu_custom_call.1} parent=5 // pred_check
        %p434 = pneg %p433
      $region58: #{tpu_custom_call.1} parent=5 // pred_check_branch
        %436 = sbr.rel (%p434) target = $region60
      $region59: #{tpu_custom_call.1} parent=5 // pred_region
        %s437 = ssub.s32 %s20, 2
        // Predicated region
        $region61: #{tpu_custom_call.1} parent=59 // pred_check
          %p438 = pneg %p139
        $region62: #{tpu_custom_call.1} parent=59 // pred_check_branch
          %440 = sbr.rel (%p438) target = $region64
        $region63: #{tpu_custom_call.1} parent=59 // pred_region
          %s441 = sand.u32 %s124, 1
          %s442 = scalar_lea.sflag [#allocation5], %s441
          %s443 = sand.u32 %s124, 1
          %s444 = smul.addr %s443, 8
          %s445 = scalar_lea.vmem [#allocation9], %s444
          %447 = dma.done %s442, 128
        $region64: #{tpu_custom_call.1} parent=59 // pred_fallthru
          _
        // Predicated region
        $region65: #{tpu_custom_call.1} parent=59 // pred_check
          %p448 = pneg %p167
        $region66: #{tpu_custom_call.1} parent=59 // pred_check_branch
          %450 = sbr.rel (%p448) target = $region68
        $region67: #{tpu_custom_call.1} parent=59 // pred_region
          %p451 = scmp.lt.s32.totalorder %s32, 3
          %s452 = scalar_select %p451, %s32, 3
          %p453 = scmp.lt.s32.totalorder %s31, 2
          %s454 = scalar_select %p453, %s31, 2
          %s455 = smul.addr %s452, 3
          %s456 = sadd.s32 %s454, %s455
          %s457 = smul.addr %s456, 8
          %s458 = scalar_lea.vmem %s4, %s457
        $region68: #{tpu_custom_call.1} parent=59 // pred_fallthru
          _
      $region60: #{tpu_custom_call.1} parent=5 // pred_fallthru
        _
    $region6: #{tpu_custom_call.1} parent=1 // loop_footer
      %s24 = sadd.s32 1, %s20
    $region7: #{tpu_custom_call.1} parent=1 // loop_footer_branch
      %19 = sbr.rel target = $region3
    $region8: #{tpu_custom_call.1} parent=1 // loop_exit
      _
    %459 = vsyncpa [#allocation4], 1
    %s460 = scalar_lea.sflag [#allocation4], 1
    %461 = vsyncpa %s460, 1
    %462 = vsyncpa [#allocation7], 1
    %s463 = scalar_lea.sflag [#allocation7], 1
    %464 = vsyncpa %s463, 1
    %465 = vsyncpa [#allocation5], 1
    %s466 = scalar_lea.sflag [#allocation5], 1
    %467 = vsyncpa %s466, 1

</llo_original>
